<compile_context>
chip_gen: v7x
topology: tpu7x:2x2x1
jax: 0.10.0
libtpu: 0.0.40
codegen_flags: <defaults>
</compile_context>

<pallas_src>
import functools
import math

import jax
import jax.numpy as jnp
from jax import lax
from jax.experimental import pallas as pl
from jax.experimental.pallas import tpu as pltpu


def _coordconv_kernel(x_ref, w_ref, b_ref, o_ref, *, H, W, KH, KW, padding):
    """Single-matmul CoordConv for one batch element.

    x_ref : (C, H*W)        f32   image channels, spatial flattened on lanes
    w_ref : (Cout, KH*KW*CP) bf16 tap-major / channel-minor weight (CP = pad8(C+2))
    b_ref : (Cout, 1)       f32   bias
    o_ref : (Cout, H*W)     f32   NCHW-flat output (lane dense)
    """
    C = x_ref.shape[0]
    HW = H * W
    CP = ((C + 2 + 7) // 8) * 8  # per-tap channel block, sublane aligned

    # ---- AddCoords: coordinate channels generated in-kernel -----------------
    k = lax.broadcasted_iota(jnp.int32, (1, HW), 1).astype(jnp.float32)  # flat idx
    i = jnp.floor((k + 0.5) * (1.0 / W))          # row index (exact for these sizes)
    j = k - i * W                                  # col index
    xx = i * (2.0 / (H - 1)) - 1.0                 # varies along H (matches PyTorch)
    yy = j * (2.0 / (W - 1)) - 1.0                 # varies along W

    x = x_ref[...].astype(jnp.float32)             # (C, HW)
    parts = [x, xx, yy]
    if CP > C + 2:
        parts.append(jnp.zeros((CP - C - 2, HW), jnp.float32))
    feat = jnp.concatenate(parts, axis=0)          # (CP, HW), sublane aligned
    feat2 = jnp.concatenate([feat, feat], axis=1)  # (CP, 2*HW), 128-aligned lane concat

    # ---- im2col: one lane-shifted + masked block per conv tap ---------------
    blocks = []
    for kh in range(KH):
        for kw in range(KW):
            dy, dx = kh - padding, kw - padding
            s = (dy * W + dx) % HW
            shifted = feat2[:, s:s + HW]           # feat[:, (k + dy*W + dx) mod HW]
            valid = ((i >= -dy) & (i <= (H - 1) - dy)
                     & (j >= -dx) & (j <= (W - 1) - dx))   # (1, HW)
            blocks.append(jnp.where(valid, shifted, 0.0))  # (CP, HW)
    cols = jnp.concatenate(blocks, axis=0)         # (KH*KW*CP, HW)

    # ---- single MXU matmul (bf16 operands, f32 accumulation) + bias ---------
    acc = jnp.dot(w_ref[...], cols.astype(w_ref.dtype),
                  preferred_element_type=jnp.float32)      # (Cout, HW)
    o_ref[...] = (acc + b_ref[...]).astype(o_ref.dtype)


def coord_conv(x_nchw, weight, bias, *, padding=1, stride=1):
    """CoordConv forward: AddCoords (with_r=False) + Conv2d(KHxKW, stride=1)."""
    assert stride == 1, "only stride=1 implemented"
    B, C, H, W = x_nchw.shape
    Cout, Cin, KH, KW = weight.shape
    assert Cin == C + 2, "Conv expects in_channels + 2 coord channels"

    H_out = H + 2 * padding - KH + 1
    W_out = W + 2 * padding - KW + 1
    # TODO(synk): support 2*padding > K-1 (output larger than input); the
    # flattened-spatial formulation computes outputs at input positions only.
    assert 1 <= H_out <= H and 1 <= W_out <= W, "requires 2*padding <= kernel-1"

    CP = ((Cin + 7) // 8) * 8
    Ktot = KH * KW * CP

    # PyTorch OIHW weight -> (Cout, KH*KW*CP) tap-major/channel-minor, bf16.
    wp = jnp.pad(weight, ((0, 0), (0, CP - Cin), (0, 0), (0, 0)))
    w2 = jnp.transpose(wp, (0, 2, 3, 1)).reshape(Cout, Ktot).astype(jnp.bfloat16)
    b2 = bias.reshape(Cout, 1).astype(jnp.float32)

    # Free reshape: NCHW with spatial flattened on the lane dim.
    x_flat = x_nchw.reshape(B, C, H * W).astype(jnp.float32)

    kernel = functools.partial(_coordconv_kernel,
                               H=H, W=W, KH=KH, KW=KW, padding=padding)
    out_flat = pl.pallas_call(
        kernel,
        out_shape=jax.ShapeDtypeStruct((B, Cout, H * W), jnp.float32),
        grid_spec=pltpu.PrefetchScalarGridSpec(
            num_scalar_prefetch=0,
            grid=(B,),
            in_specs=[
                pl.BlockSpec((None, C, H * W), lambda b: (b, 0, 0)),
                pl.BlockSpec((Cout, Ktot), lambda b: (0, 0)),
                pl.BlockSpec((Cout, 1), lambda b: (0, 0)),
            ],
            out_specs=pl.BlockSpec((None, Cout, H * W), lambda b: (b, 0, 0)),
        ),
        compiler_params=pltpu.CompilerParams(dimension_semantics=("parallel",)),
    )(x_flat, w2, b2)

    # Free reshape back to NCHW; slice is a no-op for 'same' convs.
    out = out_flat.reshape(B, Cout, H, W)[:, :, :H_out, :W_out]
    return out.astype(x_nchw.dtype)


def _reference(x_nchw, weight, bias, *, padding=1):
    """Pure-JAX (f32) reference of CoordConv.forward for verification."""
    B, C, H, W = x_nchw.shape
    xx = (jnp.arange(H, dtype=x_nchw.dtype) / (H - 1)) * 2.0 - 1.0
    yy = (jnp.arange(W, dtype=x_nchw.dtype) / (W - 1)) * 2.0 - 1.0
    xx = jnp.broadcast_to(xx[:, None], (H, W))[None, None]
    yy = jnp.broadcast_to(yy[None, :], (H, W))[None, None]
    xx = jnp.broadcast_to(xx, (B, 1, H, W))
    yy = jnp.broadcast_to(yy, (B, 1, H, W))
    feat = jnp.concatenate([x_nchw, xx, yy], axis=1)
    out = jax.lax.conv_general_dilated(
        feat, weight, window_strides=(1, 1),
        padding=[(padding, padding), (padding, padding)],
        dimension_numbers=("NCHW", "OIHW", "NCHW"),
    )
    return out + bias[None, :, None, None]


if __name__ == "__main__":
    # Module config: CoordConv(in_channels=4, out_channels=8, kernel_size=3, padding=1)
    B, C, H, W = 2, 4, 16, 16
    Cout, KH, KW = 8, 3, 3
    Cin = C + 2

    key = jax.random.PRNGKey(0)
    kx, kw_, kb = jax.random.split(key, 3)
    x = jax.random.normal(kx, (B, C, H, W), jnp.float32)

    # Deterministic Conv2d-style init: U(-1/sqrt(fan_in), 1/sqrt(fan_in))
    fan_in = Cin * KH * KW
    bound = 1.0 / math.sqrt(fan_in)
    weight = jax.random.uniform(kw_, (Cout, Cin, KH, KW), jnp.float32, -bound, bound)
    bias = jax.random.uniform(kb, (Cout,), jnp.float32, -bound, bound)

    out = jax.block_until_ready(coord_conv(x, weight, bias, padding=1))
    ref = jax.block_until_ready(_reference(x, weight, bias, padding=1))

    assert out.shape == (B, Cout, H, W), out.shape
    # bf16 matmul operands with f32 accumulation -> relaxed tolerance vs f32 ref.
    err = float(jnp.max(jnp.abs(out - ref)))
    assert jnp.allclose(out, ref, atol=2e-2, rtol=2e-2), err
    print("KERNEL_OK")
</pallas_src>

<mosaic_0001>
module attributes {stable_mosaic.version = 11 : i64} {
  func.func @_coordconv_kernel(%arg0: i32, %arg1: memref<1x4x256xf32, #tpu.memory_space<vmem>>, %arg2: memref<8x72xbf16, #tpu.memory_space<vmem>>, %arg3: memref<8x1xf32, #tpu.memory_space<vmem>>, %arg4: memref<1x8x256xf32, #tpu.memory_space<vmem>>) attributes {dimension_semantics = [#tpu.dimension_semantics<parallel>], iteration_bounds = array<i64: 2>, scalar_prefetch = 0 : i64, scratch_operands = 0 : i64, tpu.core_type = #tpu.core_type<tc>, window_params = [{transform_indices = @transform_0, window_bounds = array<i64: 1, 4, 256>}, {pipeline_mode = #tpu.pipeline_mode<synchronous>, transform_indices = @transform_1, window_bounds = array<i64: 8, 72>}, {pipeline_mode = #tpu.pipeline_mode<synchronous>, transform_indices = @transform_2, window_bounds = array<i64: 8, 1>}, {transform_indices = @transform_3, window_bounds = array<i64: 1, 8, 256>}]} {
    %0 = tpu.iota {dimensions = array<i32: 1>} : vector<1x256xi32>
    %1 = arith.sitofp %0 : vector<1x256xi32> to vector<1x256xf32>
    %cst = arith.constant 5.000000e-01 : f32
    %2 = vector.broadcast %cst : f32 to vector<1x256xf32>
    %3 = arith.addf %1, %2 : vector<1x256xf32>
    %cst_0 = arith.constant 6.250000e-02 : f32
    %4 = vector.broadcast %cst_0 : f32 to vector<1x256xf32>
    %5 = arith.mulf %3, %4 : vector<1x256xf32>
    %6 = math.floor %5 : vector<1x256xf32>
    %cst_1 = arith.constant 1.600000e+01 : f32
    %7 = vector.broadcast %cst_1 : f32 to vector<1x256xf32>
    %8 = arith.mulf %6, %7 : vector<1x256xf32>
    %9 = arith.subf %1, %8 : vector<1x256xf32>
    %cst_2 = arith.constant 0.13333334 : f32
    %10 = vector.broadcast %cst_2 : f32 to vector<1x256xf32>
    %11 = arith.mulf %6, %10 : vector<1x256xf32>
    %cst_3 = arith.constant 1.000000e+00 : f32
    %12 = vector.broadcast %cst_3 : f32 to vector<1x256xf32>
    %13 = arith.subf %11, %12 : vector<1x256xf32>
    %cst_4 = arith.constant 0.13333334 : f32
    %14 = vector.broadcast %cst_4 : f32 to vector<1x256xf32>
    %15 = arith.mulf %9, %14 : vector<1x256xf32>
    %cst_5 = arith.constant 1.000000e+00 : f32
    %16 = vector.broadcast %cst_5 : f32 to vector<1x256xf32>
    %17 = arith.subf %15, %16 : vector<1x256xf32>
    %c0 = arith.constant 0 : index
    %c0_6 = arith.constant 0 : index
    %c0_7 = arith.constant 0 : index
    %18 = vector.load %arg1[%c0, %c0_6, %c0_7] : memref<1x4x256xf32, #tpu.memory_space<vmem>>, vector<1x4x256xf32>
    %19 = vector.shape_cast %18 : vector<1x4x256xf32> to vector<4x256xf32>
    %cst_8 = arith.constant 0.000000e+00 : f32
    %20 = vector.broadcast %cst_8 : f32 to vector<2x256xf32>
    %21 = tpu.concatenate %19, %13, %17, %20 in 0 : vector<4x256xf32>, vector<1x256xf32>, vector<1x256xf32>, vector<2x256xf32> -> vector<8x256xf32>
    %22 = tpu.concatenate %21, %21 in 1 : vector<8x256xf32>, vector<8x256xf32> -> vector<8x512xf32>
    %23 = vector.extract_strided_slice %22 {offsets = [0, 239], sizes = [8, 256], strides = [1, 1]} : vector<8x512xf32> to vector<8x256xf32>
    %cst_9 = arith.constant 1.000000e+00 : f32
    %24 = vector.broadcast %cst_9 : f32 to vector<1x256xf32>
    %25 = arith.cmpf oge, %6, %24 : vector<1x256xf32>
    %cst_10 = arith.constant 1.600000e+01 : f32
    %26 = vector.broadcast %cst_10 : f32 to vector<1x256xf32>
    %27 = arith.cmpf ole, %6, %26 : vector<1x256xf32>
    %28 = arith.andi %25, %27 : vector<1x256xi1>
    %cst_11 = arith.constant 1.000000e+00 : f32
    %29 = vector.broadcast %cst_11 : f32 to vector<1x256xf32>
    %30 = arith.cmpf oge, %9, %29 : vector<1x256xf32>
    %31 = arith.andi %28, %30 : vector<1x256xi1>
    %cst_12 = arith.constant 1.600000e+01 : f32
    %32 = vector.broadcast %cst_12 : f32 to vector<1x256xf32>
    %33 = arith.cmpf ole, %9, %32 : vector<1x256xf32>
    %34 = arith.andi %31, %33 : vector<1x256xi1>
    %cst_13 = arith.constant 0.000000e+00 : f32
    %35 = vector.shape_cast %34 : vector<1x256xi1> to vector<1x256xi1>
    %36 = vector.broadcast %35 : vector<1x256xi1> to vector<8x256xi1>
    %37 = vector.broadcast %cst_13 : f32 to vector<8x256xf32>
    %38 = arith.select %36, %23, %37 : vector<8x256xi1>, vector<8x256xf32>
    %39 = vector.extract_strided_slice %22 {offsets = [0, 240], sizes = [8, 256], strides = [1, 1]} : vector<8x512xf32> to vector<8x256xf32>
    %cst_14 = arith.constant 1.000000e+00 : f32
    %40 = vector.broadcast %cst_14 : f32 to vector<1x256xf32>
    %41 = arith.cmpf oge, %6, %40 : vector<1x256xf32>
    %cst_15 = arith.constant 1.600000e+01 : f32
    %42 = vector.broadcast %cst_15 : f32 to vector<1x256xf32>
    %43 = arith.cmpf ole, %6, %42 : vector<1x256xf32>
    %44 = arith.andi %41, %43 : vector<1x256xi1>
    %cst_16 = arith.constant 0.000000e+00 : f32
    %45 = vector.broadcast %cst_16 : f32 to vector<1x256xf32>
    %46 = arith.cmpf oge, %9, %45 : vector<1x256xf32>
    %47 = arith.andi %44, %46 : vector<1x256xi1>
    %cst_17 = arith.constant 1.500000e+01 : f32
    %48 = vector.broadcast %cst_17 : f32 to vector<1x256xf32>
    %49 = arith.cmpf ole, %9, %48 : vector<1x256xf32>
    %50 = arith.andi %47, %49 : vector<1x256xi1>
    %cst_18 = arith.constant 0.000000e+00 : f32
    %51 = vector.shape_cast %50 : vector<1x256xi1> to vector<1x256xi1>
    %52 = vector.broadcast %51 : vector<1x256xi1> to vector<8x256xi1>
    %53 = vector.broadcast %cst_18 : f32 to vector<8x256xf32>
    %54 = arith.select %52, %39, %53 : vector<8x256xi1>, vector<8x256xf32>
    %55 = vector.extract_strided_slice %22 {offsets = [0, 241], sizes = [8, 256], strides = [1, 1]} : vector<8x512xf32> to vector<8x256xf32>
    %cst_19 = arith.constant 1.000000e+00 : f32
    %56 = vector.broadcast %cst_19 : f32 to vector<1x256xf32>
    %57 = arith.cmpf oge, %6, %56 : vector<1x256xf32>
    %cst_20 = arith.constant 1.600000e+01 : f32
    %58 = vector.broadcast %cst_20 : f32 to vector<1x256xf32>
    %59 = arith.cmpf ole, %6, %58 : vector<1x256xf32>
    %60 = arith.andi %57, %59 : vector<1x256xi1>
    %cst_21 = arith.constant -1.000000e+00 : f32
    %61 = vector.broadcast %cst_21 : f32 to vector<1x256xf32>
    %62 = arith.cmpf oge, %9, %61 : vector<1x256xf32>
    %63 = arith.andi %60, %62 : vector<1x256xi1>
    %cst_22 = arith.constant 1.400000e+01 : f32
    %64 = vector.broadcast %cst_22 : f32 to vector<1x256xf32>
    %65 = arith.cmpf ole, %9, %64 : vector<1x256xf32>
    %66 = arith.andi %63, %65 : vector<1x256xi1>
    %cst_23 = arith.constant 0.000000e+00 : f32
    %67 = vector.shape_cast %66 : vector<1x256xi1> to vector<1x256xi1>
    %68 = vector.broadcast %67 : vector<1x256xi1> to vector<8x256xi1>
    %69 = vector.broadcast %cst_23 : f32 to vector<8x256xf32>
    %70 = arith.select %68, %55, %69 : vector<8x256xi1>, vector<8x256xf32>
    %71 = vector.extract_strided_slice %22 {offsets = [0, 255], sizes = [8, 256], strides = [1, 1]} : vector<8x512xf32> to vector<8x256xf32>
    %cst_24 = arith.constant 0.000000e+00 : f32
    %72 = vector.broadcast %cst_24 : f32 to vector<1x256xf32>
    %73 = arith.cmpf oge, %6, %72 : vector<1x256xf32>
    %cst_25 = arith.constant 1.500000e+01 : f32
    %74 = vector.broadcast %cst_25 : f32 to vector<1x256xf32>
    %75 = arith.cmpf ole, %6, %74 : vector<1x256xf32>
    %76 = arith.andi %73, %75 : vector<1x256xi1>
    %cst_26 = arith.constant 1.000000e+00 : f32
    %77 = vector.broadcast %cst_26 : f32 to vector<1x256xf32>
    %78 = arith.cmpf oge, %9, %77 : vector<1x256xf32>
    %79 = arith.andi %76, %78 : vector<1x256xi1>
    %cst_27 = arith.constant 1.600000e+01 : f32
    %80 = vector.broadcast %cst_27 : f32 to vector<1x256xf32>
    %81 = arith.cmpf ole, %9, %80 : vector<1x256xf32>
    %82 = arith.andi %79, %81 : vector<1x256xi1>
    %cst_28 = arith.constant 0.000000e+00 : f32
    %83 = vector.shape_cast %82 : vector<1x256xi1> to vector<1x256xi1>
    %84 = vector.broadcast %83 : vector<1x256xi1> to vector<8x256xi1>
    %85 = vector.broadcast %cst_28 : f32 to vector<8x256xf32>
    %86 = arith.select %84, %71, %85 : vector<8x256xi1>, vector<8x256xf32>
    %87 = vector.extract_strided_slice %22 {offsets = [0, 0], sizes = [8, 256], strides = [1, 1]} : vector<8x512xf32> to vector<8x256xf32>
    %cst_29 = arith.constant 0.000000e+00 : f32
    %88 = vector.broadcast %cst_29 : f32 to vector<1x256xf32>
    %89 = arith.cmpf oge, %6, %88 : vector<1x256xf32>
    %cst_30 = arith.constant 1.500000e+01 : f32
    %90 = vector.broadcast %cst_30 : f32 to vector<1x256xf32>
    %91 = arith.cmpf ole, %6, %90 : vector<1x256xf32>
    %92 = arith.andi %89, %91 : vector<1x256xi1>
    %cst_31 = arith.constant 0.000000e+00 : f32
    %93 = vector.broadcast %cst_31 : f32 to vector<1x256xf32>
    %94 = arith.cmpf oge, %9, %93 : vector<1x256xf32>
    %95 = arith.andi %92, %94 : vector<1x256xi1>
    %cst_32 = arith.constant 1.500000e+01 : f32
    %96 = vector.broadcast %cst_32 : f32 to vector<1x256xf32>
    %97 = arith.cmpf ole, %9, %96 : vector<1x256xf32>
    %98 = arith.andi %95, %97 : vector<1x256xi1>
    %cst_33 = arith.constant 0.000000e+00 : f32
    %99 = vector.shape_cast %98 : vector<1x256xi1> to vector<1x256xi1>
    %100 = vector.broadcast %99 : vector<1x256xi1> to vector<8x256xi1>
    %101 = vector.broadcast %cst_33 : f32 to vector<8x256xf32>
    %102 = arith.select %100, %87, %101 : vector<8x256xi1>, vector<8x256xf32>
    %103 = vector.extract_strided_slice %22 {offsets = [0, 1], sizes = [8, 256], strides = [1, 1]} : vector<8x512xf32> to vector<8x256xf32>
    %cst_34 = arith.constant 0.000000e+00 : f32
    %104 = vector.broadcast %cst_34 : f32 to vector<1x256xf32>
    %105 = arith.cmpf oge, %6, %104 : vector<1x256xf32>
    %cst_35 = arith.constant 1.500000e+01 : f32
    %106 = vector.broadcast %cst_35 : f32 to vector<1x256xf32>
    %107 = arith.cmpf ole, %6, %106 : vector<1x256xf32>
    %108 = arith.andi %105, %107 : vector<1x256xi1>
    %cst_36 = arith.constant -1.000000e+00 : f32
    %109 = vector.broadcast %cst_36 : f32 to vector<1x256xf32>
    %110 = arith.cmpf oge, %9, %109 : vector<1x256xf32>
    %111 = arith.andi %108, %110 : vector<1x256xi1>
    %cst_37 = arith.constant 1.400000e+01 : f32
    %112 = vector.broadcast %cst_37 : f32 to vector<1x256xf32>
    %113 = arith.cmpf ole, %9, %112 : vector<1x256xf32>
    %114 = arith.andi %111, %113 : vector<1x256xi1>
    %cst_38 = arith.constant 0.000000e+00 : f32
    %115 = vector.shape_cast %114 : vector<1x256xi1> to vector<1x256xi1>
    %116 = vector.broadcast %115 : vector<1x256xi1> to vector<8x256xi1>
    %117 = vector.broadcast %cst_38 : f32 to vector<8x256xf32>
    %118 = arith.select %116, %103, %117 : vector<8x256xi1>, vector<8x256xf32>
    %119 = vector.extract_strided_slice %22 {offsets = [0, 15], sizes = [8, 256], strides = [1, 1]} : vector<8x512xf32> to vector<8x256xf32>
    %cst_39 = arith.constant -1.000000e+00 : f32
    %120 = vector.broadcast %cst_39 : f32 to vector<1x256xf32>
    %121 = arith.cmpf oge, %6, %120 : vector<1x256xf32>
    %cst_40 = arith.constant 1.400000e+01 : f32
    %122 = vector.broadcast %cst_40 : f32 to vector<1x256xf32>
    %123 = arith.cmpf ole, %6, %122 : vector<1x256xf32>
    %124 = arith.andi %121, %123 : vector<1x256xi1>
    %cst_41 = arith.constant 1.000000e+00 : f32
    %125 = vector.broadcast %cst_41 : f32 to vector<1x256xf32>
    %126 = arith.cmpf oge, %9, %125 : vector<1x256xf32>
    %127 = arith.andi %124, %126 : vector<1x256xi1>
    %cst_42 = arith.constant 1.600000e+01 : f32
    %128 = vector.broadcast %cst_42 : f32 to vector<1x256xf32>
    %129 = arith.cmpf ole, %9, %128 : vector<1x256xf32>
    %130 = arith.andi %127, %129 : vector<1x256xi1>
    %cst_43 = arith.constant 0.000000e+00 : f32
    %131 = vector.shape_cast %130 : vector<1x256xi1> to vector<1x256xi1>
    %132 = vector.broadcast %131 : vector<1x256xi1> to vector<8x256xi1>
    %133 = vector.broadcast %cst_43 : f32 to vector<8x256xf32>
    %134 = arith.select %132, %119, %133 : vector<8x256xi1>, vector<8x256xf32>
    %135 = vector.extract_strided_slice %22 {offsets = [0, 16], sizes = [8, 256], strides = [1, 1]} : vector<8x512xf32> to vector<8x256xf32>
    %cst_44 = arith.constant -1.000000e+00 : f32
    %136 = vector.broadcast %cst_44 : f32 to vector<1x256xf32>
    %137 = arith.cmpf oge, %6, %136 : vector<1x256xf32>
    %cst_45 = arith.constant 1.400000e+01 : f32
    %138 = vector.broadcast %cst_45 : f32 to vector<1x256xf32>
    %139 = arith.cmpf ole, %6, %138 : vector<1x256xf32>
    %140 = arith.andi %137, %139 : vector<1x256xi1>
    %cst_46 = arith.constant 0.000000e+00 : f32
    %141 = vector.broadcast %cst_46 : f32 to vector<1x256xf32>
    %142 = arith.cmpf oge, %9, %141 : vector<1x256xf32>
    %143 = arith.andi %140, %142 : vector<1x256xi1>
    %cst_47 = arith.constant 1.500000e+01 : f32
    %144 = vector.broadcast %cst_47 : f32 to vector<1x256xf32>
    %145 = arith.cmpf ole, %9, %144 : vector<1x256xf32>
    %146 = arith.andi %143, %145 : vector<1x256xi1>
    %cst_48 = arith.constant 0.000000e+00 : f32
    %147 = vector.shape_cast %146 : vector<1x256xi1> to vector<1x256xi1>
    %148 = vector.broadcast %147 : vector<1x256xi1> to vector<8x256xi1>
    %149 = vector.broadcast %cst_48 : f32 to vector<8x256xf32>
    %150 = arith.select %148, %135, %149 : vector<8x256xi1>, vector<8x256xf32>
    %151 = vector.extract_strided_slice %22 {offsets = [0, 17], sizes = [8, 256], strides = [1, 1]} : vector<8x512xf32> to vector<8x256xf32>
    %cst_49 = arith.constant -1.000000e+00 : f32
    %152 = vector.broadcast %cst_49 : f32 to vector<1x256xf32>
    %153 = arith.cmpf oge, %6, %152 : vector<1x256xf32>
    %cst_50 = arith.constant 1.400000e+01 : f32
    %154 = vector.broadcast %cst_50 : f32 to vector<1x256xf32>
    %155 = arith.cmpf ole, %6, %154 : vector<1x256xf32>
    %156 = arith.andi %153, %155 : vector<1x256xi1>
    %cst_51 = arith.constant -1.000000e+00 : f32
    %157 = vector.broadcast %cst_51 : f32 to vector<1x256xf32>
    %158 = arith.cmpf oge, %9, %157 : vector<1x256xf32>
    %159 = arith.andi %156, %158 : vector<1x256xi1>
    %cst_52 = arith.constant 1.400000e+01 : f32
    %160 = vector.broadcast %cst_52 : f32 to vector<1x256xf32>
    %161 = arith.cmpf ole, %9, %160 : vector<1x256xf32>
    %162 = arith.andi %159, %161 : vector<1x256xi1>
    %cst_53 = arith.constant 0.000000e+00 : f32
    %163 = vector.shape_cast %162 : vector<1x256xi1> to vector<1x256xi1>
    %164 = vector.broadcast %163 : vector<1x256xi1> to vector<8x256xi1>
    %165 = vector.broadcast %cst_53 : f32 to vector<8x256xf32>
    %166 = arith.select %164, %151, %165 : vector<8x256xi1>, vector<8x256xf32>
    %167 = tpu.concatenate %38, %54, %70, %86, %102, %118, %134, %150, %166 in 0 : vector<8x256xf32>, vector<8x256xf32>, vector<8x256xf32>, vector<8x256xf32>, vector<8x256xf32>, vector<8x256xf32>, vector<8x256xf32>, vector<8x256xf32>, vector<8x256xf32> -> vector<72x256xf32>
    %c0_54 = arith.constant 0 : index
    %c0_55 = arith.constant 0 : index
    %168 = vector.load %arg2[%c0_54, %c0_55] : memref<8x72xbf16, #tpu.memory_space<vmem>>, vector<8x72xbf16>
    %169 = arith.truncf %167 : vector<72x256xf32> to vector<72x256xbf16>
    %cst_56 = arith.constant dense<0.000000e+00> : vector<8x256xf32>
    %170 = tpu.matmul %168, %169, %cst_56 {dimension_numbers = #tpu.dot_dimension_numbers<[1], [0], [0], [1], [0, 0, 1, 1], [], []>} : vector<8x72xbf16>, vector<72x256xbf16>, vector<8x256xf32> -> vector<8x256xf32>
    %c0_57 = arith.constant 0 : index
    %c0_58 = arith.constant 0 : index
    %171 = vector.load %arg3[%c0_57, %c0_58] : memref<8x1xf32, #tpu.memory_space<vmem>>, vector<8x1xf32>
    %172 = vector.broadcast %171 : vector<8x1xf32> to vector<8x256xf32>
    %173 = arith.addf %170, %172 : vector<8x256xf32>
    %c0_59 = arith.constant 0 : index
    %c0_60 = arith.constant 0 : index
    %c0_61 = arith.constant 0 : index
    %174 = vector.load %arg4[%c0_59, %c0_60, %c0_61] : memref<1x8x256xf32, #tpu.memory_space<vmem>>, vector<1x8x256xf32>
    %175 = vector.shape_cast %174 : vector<1x8x256xf32> to vector<8x256xf32>
    %176 = vector.shape_cast %173 : vector<8x256xf32> to vector<1x8x256xf32>
    tpu.vector_store %arg4[%c0_59, %c0_60, %c0_61], %176 {strides = array<i32>} : memref<1x8x256xf32, #tpu.memory_space<vmem>>, vector<1x8x256xf32>,
    return
  }
  func.func @transform_0(%arg0: i32) -> (i32, i32, i32) {
    %c0_i32 = arith.constant 0 : i32
    %c0_i32_0 = arith.constant 0 : i32
    %c0_i32_1 = arith.constant 0 : i32
    return %arg0, %c0_i32, %c0_i32_0 : i32, i32, i32
  }
  func.func @transform_1(%arg0: i32) -> (i32, i32) {
    %c0_i32 = arith.constant 0 : i32
    %c0_i32_0 = arith.constant 0 : i32
    %c0_i32_1 = arith.constant 0 : i32
    return %c0_i32, %c0_i32_0 : i32, i32
  }
  func.func @transform_2(%arg0: i32) -> (i32, i32) {
    %c0_i32 = arith.constant 0 : i32
    %c0_i32_0 = arith.constant 0 : i32
    %c0_i32_1 = arith.constant 0 : i32
    return %c0_i32, %c0_i32_0 : i32, i32
  }
  func.func @transform_3(%arg0: i32) -> (i32, i32, i32) {
    %c0_i32 = arith.constant 0 : i32
    %c0_i32_0 = arith.constant 0 : i32
    %c0_i32_1 = arith.constant 0 : i32
    return %arg0, %c0_i32, %c0_i32_0 : i32, i32, i32
  }
}

</mosaic_0001>

<llo_original>
// kernel: tpu_custom_call.1
$region0: #{tpu_custom_call.1}
  #allocation0 [shape = 'u32[]', space=smem, size = 0x4, offset = 0x4, fixed_abs, tag = 'smem constant byte address 0x4 - core index']
  #allocation1 [shape = 'u32[144,128]{1,0:T(1,128)}', space=vmem, size = 0x12000, scoped, tag = 'internal scratch']
  %s0 = inlined_call_operand.hbm [shape: f32[2,4,256], index: 0, kind: input, shape index: {}]
  %s1 = inlined_call_operand.vmem [shape: bf16[8,72], index: 1, kind: input, shape index: {}]
  %s2 = inlined_call_operand.vmem [shape: f32[8,1], index: 2, kind: input, shape index: {}]
  %s3 = inlined_call_operand.hbm [shape: f32[2,8,256], index: 3, kind: output, shape index: {}]
  %s4 = sld [smem:[#allocation0]]
  $region49: #{tpu_custom_call.1} parent=0
    _
  %s6 = ssub.s32 1, %s4
  %s7 = scalar_select 0, %s6, %s4
  $region1: #{tpu_custom_call.1} parent=0
    #allocation2 [shape = 'u8[8192]{0}', space=vmem, size = 0x2000, scoped, tag = 'input window, operand 0']
    #allocation3 [shape = 's32[2]{0}', space=sflag, size = 0x8, scoped, tag = 'scoped memory for tpu_custom_call.1']
    #allocation4 [shape = 's32[2]{0}', space=sflag, size = 0x8, scoped, tag = 'scoped memory for tpu_custom_call.1']
    #allocation5 [shape = 'u8[16384]{0}', space=vmem, size = 0x4000, scoped, tag = 'output window, operand 0']
    %8 = vsyncpa [#allocation3], 0
    %s9 = scalar_lea.sflag [#allocation3], 1
    %10 = vsyncpa %s9, 0
    %11 = vsyncpa [#allocation4], 0
    %s12 = scalar_lea.sflag [#allocation4], 1
    %13 = vsyncpa %s12, 0
    loop: start=0, step=1, limit=4
    $region2: #{tpu_custom_call.1} parent=1 // loop_pre_header
      _
    $region3: #{tpu_custom_call.1} parent=1 // loop_header
      %s15 = sphi 0, %s19
      %p16 = scmp.ge.s32.totalorder %s15, 4
      %s25 = sphi 0, %s27
      %s28 = sphi 0, %s25
      %s29 = sphi 0, %s28
      %s45 = sphi 0, %s29
      %s49 = sphi 0, %s49
      %s51 = sphi 0, %s49
      %s52 = sphi 0, %s51
      %s66 = sphi 0, %s52
      %s70 = sphi 0, %s70
      %s72 = sphi 0, %s70
      %s73 = sphi 0, %s72
      %s87 = sphi 0, %s73
      %s93 = sphi 0, %s95
      %s96 = sphi 0, %s93
      %s97 = sphi 0, %s96
      %s113 = sphi 0, %s97
    $region4: #{tpu_custom_call.1} parent=1 // loop_header_branch
      %18 = sbr.rel (%p16) target = $region8
    $region5: #{tpu_custom_call.1} parent=1 // loop_body
      %s20 = ssub.s32 %s15, 1
      %s21 = ssub.s32 %s15, 2
      %s22 = sadd.s32 %s15, 1
      %s23 = ssub.s32 %s15, %s22
      %p24 = scmp.eq.s32.totalorder %s23, 0
      %s26 = sadd.s32 %s25, 1
      %s27 = scalar_select %p24, %s25, %s26
      %p30 = pneg %p24
      %p31 = scmp.eq.s32.totalorder %s15, 1
      %p32 = por %p30, %p31
      %p33 = scmp.ne.s32.totalorder %s25, %s28
      %p34 = scmp.eq.s32.totalorder %s15, 0
      %p35 = por %p33, %p34
      %p36 = scmp.ne.s32.totalorder %s25, %s28
      %p37 = scmp.eq.s32.totalorder %s20, 1
      %p38 = por %p36, %p37
      %p39 = scmp.ne.s32.totalorder %s28, %s29
      %p40 = scmp.eq.s32.totalorder %s20, 0
      %p41 = por %p39, %p40
      %p42 = scmp.ne.s32.totalorder %s28, %s29
      %p43 = scmp.eq.s32.totalorder %s21, 1
      %p44 = por %p42, %p43
      %p46 = scmp.ne.s32.totalorder %s29, %s45
      %p47 = scmp.eq.s32.totalorder %s21, 0
      %p48 = por %p46, %p47
      %s50 = sadd.s32 %s49, 1
      %p53 = scmp.eq.s32.totalorder %s15, 1
      %p54 = scmp.ne.s32.totalorder %s49, %s51
      %p55 = scmp.eq.s32.totalorder %s15, 0
      %p56 = por %p54, %p55
      %p57 = scmp.ne.s32.totalorder %s49, %s51
      %p58 = scmp.eq.s32.totalorder %s20, 1
      %p59 = por %p57, %p58
      %p60 = scmp.ne.s32.totalorder %s51, %s52
      %p61 = scmp.eq.s32.totalorder %s20, 0
      %p62 = por %p60, %p61
      %p63 = scmp.ne.s32.totalorder %s51, %s52
      %p64 = scmp.eq.s32.totalorder %s21, 1
      %p65 = por %p63, %p64
      %p67 = scmp.ne.s32.totalorder %s52, %s66
      %p68 = scmp.eq.s32.totalorder %s21, 0
      %p69 = por %p67, %p68
      %s71 = sadd.s32 %s70, 1
      %p74 = scmp.eq.s32.totalorder %s15, 1
      %p75 = scmp.ne.s32.totalorder %s70, %s72
      %p76 = scmp.eq.s32.totalorder %s15, 0
      %p77 = por %p75, %p76
      %p78 = scmp.ne.s32.totalorder %s70, %s72
      %p79 = scmp.eq.s32.totalorder %s20, 1
      %p80 = por %p78, %p79
      %p81 = scmp.ne.s32.totalorder %s72, %s73
      %p82 = scmp.eq.s32.totalorder %s20, 0
      %p83 = por %p81, %p82
      %p84 = scmp.ne.s32.totalorder %s72, %s73
      %p85 = scmp.eq.s32.totalorder %s21, 1
      %p86 = por %p84, %p85
      %p88 = scmp.ne.s32.totalorder %s73, %s87
      %p89 = scmp.eq.s32.totalorder %s21, 0
      %p90 = por %p88, %p89
      %s91 = ssub.s32 %s15, %s22
      %p92 = scmp.eq.s32.totalorder %s91, 0
      %s94 = sadd.s32 %s93, 1
      %s95 = scalar_select %p92, %s93, %s94
      %p98 = pneg %p92
      %p99 = scmp.eq.s32.totalorder %s15, 1
      %p100 = por %p98, %p99
      %p101 = scmp.ne.s32.totalorder %s93, %s96
      %p102 = scmp.eq.s32.totalorder %s15, 0
      %p103 = por %p101, %p102
      %p104 = scmp.ne.s32.totalorder %s93, %s96
      %p105 = scmp.eq.s32.totalorder %s20, 1
      %p106 = por %p104, %p105
      %p107 = scmp.ne.s32.totalorder %s96, %s97
      %p108 = scmp.eq.s32.totalorder %s20, 0
      %p109 = por %p107, %p108
      %p110 = scmp.ne.s32.totalorder %s96, %s97
      %p111 = scmp.eq.s32.totalorder %s21, 1
      %p112 = por %p110, %p111
      %p114 = scmp.ne.s32.totalorder %s97, %s113
      %p115 = scmp.eq.s32.totalorder %s21, 0
      %p116 = por %p114, %p115
      %p117 = scmp.le.s32.totalorder 1, %s15
      %p118 = scmp.lt.s32.totalorder %s15, 3
      %p119 = pnand %p117, %p118
      %p120 = pneg %p119
      // Predicated region
      $region9: #{tpu_custom_call.1} parent=5 // pred_check
        _
      $region10: #{tpu_custom_call.1} parent=5 // pred_check_branch
        %122 = sbr.rel (%p119) target = $region12
      $region11: #{tpu_custom_call.1} parent=5 // pred_region
        %s123 = ssub.s32 %s15, 1
        // Predicated region
        $region13: #{tpu_custom_call.1} parent=11 // pred_check
          %p124 = pneg %p62
        $region14: #{tpu_custom_call.1} parent=11 // pred_check_branch
          %126 = sbr.rel (%p124) target = $region16
        $region15: #{tpu_custom_call.1} parent=11 // pred_region
          _
        $region16: #{tpu_custom_call.1} parent=11 // pred_fallthru
          _
        // Predicated region
        $region17: #{tpu_custom_call.1} parent=11 // pred_check
          %p127 = pneg %p83
        $region18: #{tpu_custom_call.1} parent=11 // pred_check_branch
          %129 = sbr.rel (%p127) target = $region20
        $region19: #{tpu_custom_call.1} parent=11 // pred_region
          _
        $region20: #{tpu_custom_call.1} parent=11 // pred_fallthru
          _
      $region12: #{tpu_custom_call.1} parent=5 // pred_fallthru
        _
      %p130 = scmp.lt.s32.totalorder %s15, 2
      // Predicated region
      $region21: #{tpu_custom_call.1} parent=5 // pred_check
        %p131 = pneg %p130
      $region22: #{tpu_custom_call.1} parent=5 // pred_check_branch
        %133 = sbr.rel (%p131) target = $region24
      $region23: #{tpu_custom_call.1} parent=5 // pred_region
        // Predicated region
        $region25: #{tpu_custom_call.1} parent=23 // pred_check
          %p134 = pneg %p35
        $region26: #{tpu_custom_call.1} parent=23 // pred_check_branch
          %136 = sbr.rel (%p134) target = $region28
        $region27: #{tpu_custom_call.1} parent=23 // pred_region
          %s137 = sand.u32 %s25, 1
          %s138 = scalar_lea.sflag [#allocation3], %s137
          %s139 = sand.u32 %s25, 1
          %s140 = smul.addr %s139, 8
          %s141 = scalar_lea.vmem [#allocation2], %s140
          %s143 = ssub.s32 128, 128
          %144 = vsyncadd %s138, %s143
          %s145 = smul.addr %s15, 2
          %s146 = smul.addr %s145, 64
          %s147 = scalar_lea.hbm %s0, %s146
          %s149 = sshll.u32 %s141, 4
          %s150 = int_to_ptr.vmem [resolvable:$true] %s149
          %152 = dma.hbm_to_vmem [thread:$0]  %s147, 128, %s150, %s138
        $region28: #{tpu_custom_call.1} parent=23 // pred_fallthru
          _
      $region24: #{tpu_custom_call.1} parent=5 // pred_fallthru
        _
      %p153 = scmp.le.s32.totalorder 1, %s15
      %p154 = scmp.lt.s32.totalorder %s15, 3
      %p155 = pnand %p153, %p154
      %p156 = pneg %p155
      // Predicated region
      $region29: #{tpu_custom_call.1} parent=5 // pred_check
        _
      $region30: #{tpu_custom_call.1} parent=5 // pred_check_branch
        %158 = sbr.rel (%p155) target = $region32
      $region31: #{tpu_custom_call.1} parent=5 // pred_region
        %s159 = ssub.s32 %s15, 1
        %s160 = sand.u32 %s28, 1
        %s161 = scalar_lea.sflag [#allocation3], %s160
        %s162 = sand.u32 %s28, 1
        %s163 = smul.addr %s162, 8
        %s164 = scalar_lea.vmem [#allocation2], %s163
        // Predicated region
        $region33: #{tpu_custom_call.1} parent=31 // pred_check
          %p165 = pneg %p41
        $region34: #{tpu_custom_call.1} parent=31 // pred_check_branch
          %167 = sbr.rel (%p165) target = $region36
        $region35: #{tpu_custom_call.1} parent=31 // pred_region
          %168 = dma.done %s161, 128
        $region36: #{tpu_custom_call.1} parent=31 // pred_fallthru
          _
        %s169 = sand.u32 %s28, 1
        %s170 = scalar_lea.sflag [#allocation3], %s169
        %s171 = sand.u32 %s28, 1
        %s172 = smul.addr %s171, 8
        %s173 = scalar_lea.vmem [#allocation2], %s172
        %p174 = pneg %p41
        %p175 = pneg %p38
        %p176 = pneg %p62
        %p177 = pneg %p59
        %p178 = pneg %p83
        %p179 = pneg %p80
        %p180 = pneg %p109
        %p181 = pneg %p106
        %s182 = sand.u32 %s96, 1
        %s183 = scalar_lea.sflag [#allocation4], %s182
        %s184 = sand.u32 %s96, 1
        %s185 = smul.addr %s184, 16
        %s186 = scalar_lea.vmem [#allocation5], %s185
        %v188 = vlaneseq
        %v189 = vand.u32 %v188, 127
        %v190 = vadd.s32 %v189, 128
        %v191 = vcvt.s32.f32 %v189
        %v192 = vcvt.s32.f32 %v190
        %v193 = vadd.f32 %v191, 0.5
        %v194 = vadd.f32 %v192, 0.5
        %v195 = vmul.f32 %v193, 0.0625
        %v196 = vmul.f32 %v194, 0.0625
        %v197 = vfloor.f32 %v195
        %v198 = vfloor.f32 %v196
        %v199 = vmul.f32 %v197, 16.0
        %v200 = vmul.f32 %v198, 16.0
        %v201 = vsub.f32 %v191, %v199
        %v202 = vsub.f32 %v192, %v200
        %v203 = vmul.f32 %v197, 0.13333334
        %v204 = vmul.f32 %v198, 0.13333334
        %v205 = vsub.f32 %v203, 1.0
        %v206 = vsub.f32 %v204, 1.0
        %v207 = vmul.f32 %v201, 0.13333334
        %v208 = vmul.f32 %v202, 0.13333334
        %v209 = vsub.f32 %v207, 1.0
        %v210 = vsub.f32 %v208, 1.0
        %v211 = vld [vmem:[%s164] sm:$0xff]
        %v213 = vcombine.high %v211, %v211
        %vm215 = vcmask 1043456
        %v216 = vsel %vm215, %v211, %v205
        %v217 = vsel %vm215, %v213, %v206
        %vm218 = vcmask 1044480
        %v219 = vsel %vm218, %v216, %v209
        %v220 = vsel %vm218, %v217, %v210
        %vm221 = vcmask 1045504
        %v222 = vsel %vm221, %v219, 0.0
        %v223 = vsel %vm221, %v220, 0.0
        %vm224 = vcmp.ge.f32.partialorder %v197, 1.0
        %vm225 = vcmp.ge.f32.partialorder %v198, 1.0
        %vm226 = vcmp.le.f32.partialorder %v197, 16.0
        %vm227 = vcmp.le.f32.partialorder %v198, 16.0
        %vm228 = vmand %vm224, %vm226
        %vm229 = vmand %vm225, %vm227
        %vm230 = vcmp.ge.f32.partialorder %v201, 1.0
        %vm231 = vcmp.ge.f32.partialorder %v202, 1.0
        %vm232 = vmand %vm228, %vm230
        %vm233 = vmand %vm229, %vm231
        %vm234 = vcmp.le.f32.partialorder %v201, 16.0
        %vm235 = vcmp.le.f32.partialorder %v202, 16.0
        %vm236 = vmand %vm232, %vm234
        %vm237 = vmand %vm233, %vm235
        %v238 = vsel %vm236, 1, 0
        %v239 = vsel %vm237, 1, 0
        %vm240 = vcmp.eq.s32.totalorder %v238, 1
        %vm241 = vcmp.eq.s32.totalorder %v239, 1
        %244 = vrot.lane.b32.xlu0 %v223, 17
        %v245 = vpop.permute.xlu0 %244
        %246 = vrot.lane.b32.xlu0 %v222, 17
        %v247 = vpop.permute.xlu0 %246
        %vm248 = vcmask 138240
        %v249 = vsel %vm248, %v245, %v247
        %v250 = vsel %vm248, %v247, %v245
        %v253 = vsel %vm240, %v249, 0.0
        %v254 = vsel %vm241, %v250, 0.0
        %vm255 = vcmp.ge.f32.partialorder %v201, 0.0
        %vm256 = vcmp.ge.f32.partialorder %v202, 0.0
        %vm257 = vmand %vm228, %vm255
        %vm258 = vmand %vm229, %vm256
        %vm259 = vcmp.le.f32.partialorder %v201, 15.0
        %vm260 = vcmp.le.f32.partialorder %v202, 15.0
        %vm261 = vmand %vm257, %vm259
        %vm262 = vmand %vm258, %vm260
        %v263 = vsel %vm261, 1, 0
        %v264 = vsel %vm262, 1, 0
        %vm265 = vcmp.eq.s32.totalorder %v263, 1
        %vm266 = vcmp.eq.s32.totalorder %v264, 1
        %267 = vrot.lane.b32.xlu0 %v223, 16
        %v268 = vpop.permute.xlu0 %267
        %269 = vrot.lane.b32.xlu0 %v222, 16
        %v270 = vpop.permute.xlu0 %269
        %vm271 = vcmask 130048
        %v272 = vsel %vm271, %v268, %v270
        %v273 = vsel %vm271, %v270, %v268
        %v276 = vsel %vm265, %v272, 0.0
        %v277 = vsel %vm266, %v273, 0.0
        %vm278 = vcmp.ge.f32.partialorder %v201, -1.0
        %vm279 = vcmp.ge.f32.partialorder %v202, -1.0
        %vm280 = vmand %vm228, %vm278
        %vm281 = vmand %vm229, %vm279
        %vm282 = vcmp.le.f32.partialorder %v201, 14.0
        %vm283 = vcmp.le.f32.partialorder %v202, 14.0
        %vm284 = vmand %vm280, %vm282
        %vm285 = vmand %vm281, %vm283
        %v286 = vsel %vm284, 1, 0
        %v287 = vsel %vm285, 1, 0
        %vm288 = vcmp.eq.s32.totalorder %v286, 1
        %vm289 = vcmp.eq.s32.totalorder %v287, 1
        %290 = vrot.lane.b32.xlu0 %v223, 15
        %v291 = vpop.permute.xlu0 %290
        %292 = vrot.lane.b32.xlu0 %v222, 15
        %v293 = vpop.permute.xlu0 %292
        %vm294 = vcmask 121856
        %v295 = vsel %vm294, %v291, %v293
        %v296 = vsel %vm294, %v293, %v291
        %v299 = vsel %vm288, %v295, 0.0
        %v300 = vsel %vm289, %v296, 0.0
        %vm301 = vcmp.ge.f32.partialorder %v197, 0.0
        %vm302 = vcmp.ge.f32.partialorder %v198, 0.0
        %vm303 = vcmp.le.f32.partialorder %v197, 15.0
        %vm304 = vcmp.le.f32.partialorder %v198, 15.0
        %vm305 = vmand %vm301, %vm303
        %vm306 = vmand %vm302, %vm304
        %vm307 = vmand %vm305, %vm230
        %vm308 = vmand %vm306, %vm231
        %vm309 = vmand %vm307, %vm234
        %vm310 = vmand %vm308, %vm235
        %v311 = vsel %vm309, 1, 0
        %v312 = vsel %vm310, 1, 0
        %vm313 = vcmp.eq.s32.totalorder %v311, 1
        %vm314 = vcmp.eq.s32.totalorder %v312, 1
        %315 = vrot.lane.b32.xlu0 %v223, 1
        %v316 = vpop.permute.xlu0 %315
        %317 = vrot.lane.b32.xlu0 %v222, 1
        %v318 = vpop.permute.xlu0 %317
        %vm319 = vcmask 7168
        %v320 = vsel %vm319, %v316, %v318
        %v321 = vsel %vm319, %v318, %v316
        %v324 = vsel %vm313, %v320, 0.0
        %v325 = vsel %vm314, %v321, 0.0
        %vm326 = vmand %vm305, %vm255
        %vm327 = vmand %vm306, %vm256
        %vm328 = vmand %vm326, %vm259
        %vm329 = vmand %vm327, %vm260
        %v330 = vsel %vm328, 1, 0
        %v331 = vsel %vm329, 1, 0
        %vm332 = vcmp.eq.s32.totalorder %v330, 1
        %vm333 = vcmp.eq.s32.totalorder %v331, 1
        %v334 = vsel %vm332, %v222, 0.0
        %v335 = vsel %vm333, %v223, 0.0
        %vm336 = vmand %vm305, %vm278
        %vm337 = vmand %vm306, %vm279
        %vm338 = vmand %vm336, %vm282
        %vm339 = vmand %vm337, %vm283
        %v340 = vsel %vm338, 1, 0
        %v341 = vsel %vm339, 1, 0
        %vm342 = vcmp.eq.s32.totalorder %v340, 1
        %vm343 = vcmp.eq.s32.totalorder %v341, 1
        %344 = vrot.lane.b32.xlu0 %v222, 127
        %v345 = vpop.permute.xlu0 %344
        %346 = vrot.lane.b32.xlu0 %v223, 127
        %v347 = vpop.permute.xlu0 %346
        %vm348 = vcmask 1039360
        %v349 = vsel %vm348, %v345, %v347
        %v350 = vsel %vm348, %v347, %v345
        %v353 = vsel %vm342, %v349, 0.0
        %v354 = vsel %vm343, %v350, 0.0
        %vm355 = vcmp.ge.f32.partialorder %v197, -1.0
        %vm356 = vcmp.ge.f32.partialorder %v198, -1.0
        %vm357 = vcmp.le.f32.partialorder %v197, 14.0
        %vm358 = vcmp.le.f32.partialorder %v198, 14.0
        %vm359 = vmand %vm355, %vm357
        %vm360 = vmand %vm356, %vm358
        %vm361 = vmand %vm359, %vm230
        %vm362 = vmand %vm360, %vm231
        %vm363 = vmand %vm361, %vm234
        %vm364 = vmand %vm362, %vm235
        %v365 = vsel %vm363, 1, 0
        %v366 = vsel %vm364, 1, 0
        %vm367 = vcmp.eq.s32.totalorder %v365, 1
        %vm368 = vcmp.eq.s32.totalorder %v366, 1
        %369 = vrot.lane.b32.xlu0 %v222, 113
        %v370 = vpop.permute.xlu0 %369
        %371 = vrot.lane.b32.xlu0 %v223, 113
        %v372 = vpop.permute.xlu0 %371
        %vm373 = vcmask 924672
        %v374 = vsel %vm373, %v370, %v372
        %v375 = vsel %vm373, %v372, %v370
        %v378 = vsel %vm367, %v374, 0.0
        %v379 = vsel %vm368, %v375, 0.0
        %vm380 = vmand %vm359, %vm255
        %vm381 = vmand %vm360, %vm256
        %vm382 = vmand %vm380, %vm259
        %vm383 = vmand %vm381, %vm260
        %v384 = vsel %vm382, 1, 0
        %v385 = vsel %vm383, 1, 0
        %vm386 = vcmp.eq.s32.totalorder %v384, 1
        %vm387 = vcmp.eq.s32.totalorder %v385, 1
        %388 = vrot.lane.b32.xlu0 %v222, 112
        %v389 = vpop.permute.xlu0 %388
        %390 = vrot.lane.b32.xlu0 %v223, 112
        %v391 = vpop.permute.xlu0 %390
        %vm392 = vcmask 916480
        %v393 = vsel %vm392, %v389, %v391
        %v394 = vsel %vm392, %v391, %v389
        %v397 = vsel %vm386, %v393, 0.0
        %v398 = vsel %vm387, %v394, 0.0
        %vm399 = vmand %vm359, %vm278
        %vm400 = vmand %vm360, %vm279
        %vm401 = vmand %vm399, %vm282
        %vm402 = vmand %vm400, %vm283
        %v403 = vsel %vm401, 1, 0
        %v404 = vsel %vm402, 1, 0
        %vm405 = vcmp.eq.s32.totalorder %v403, 1
        %vm406 = vcmp.eq.s32.totalorder %v404, 1
        %407 = vrot.lane.b32.xlu0 %v222, 111
        %v408 = vpop.permute.xlu0 %407
        %409 = vrot.lane.b32.xlu0 %v223, 111
        %v410 = vpop.permute.xlu0 %409
        %vm411 = vcmask 908288
        %v412 = vsel %vm411, %v408, %v410
        %v413 = vsel %vm411, %v410, %v408
        %v416 = vsel %vm405, %v412, 0.0
        %v417 = vsel %vm406, %v413, 0.0
        %v418 = vld [vmem:[%s1] sm:$0xf]
        %v419 = vpack.c.bf16 %v276, %v253
        %v420 = vpack.c.bf16 %v277, %v254
        %v421 = vpack.c.bf16 %v324, %v299
        %v422 = vpack.c.bf16 %v325, %v300
        %v423 = vpack.c.bf16 %v353, %v334
        %v424 = vpack.c.bf16 %v354, %v335
        %v425 = vpack.c.bf16 %v397, %v378
        %v426 = vpack.c.bf16 %v398, %v379
        %v427 = vpack.c.bf16 %v416, %v416
        %v428 = vpack.c.bf16 %v417, %v417
        %v429 = vld [vmem:[%s2] sm:$0xff]
        %431 = vset.pattern.permute.xlu0 0
        %432 = vperm.xlu0 %431, %v429
        %v433 = vpop.permute.xlu0 %432
        %vm435 = vcmask 588800
        %v437 = vsel %vm435, %v418, 0
        %v440 = vsel %vm215, %v427, 0
        %v443 = vsel %vm215, %v428, 0
        %445 = vmatprep.subr.bf16.mxu0 %v420
        %446 = vmatpush1.bf16.msra.mxu0 %v419
        %447 = vmatprep.subr.bf16.mxu0 %v422
        %448 = vmatpush1.bf16.msra.mxu0 %v421
        %449 = vmatprep.subr.bf16.mxu0 %v424
        %450 = vmatpush1.bf16.msra.mxu0 %v423
        %451 = vmatprep.subr.bf16.mxu0 %v426
        %452 = vmatpush1.bf16.msra.mxu0 %v425
        %453 = vmatprep.subr.bf16.mxu0 %v443
        %454 = vmatpush1.bf16.msra.mxu0 %v440
        %455 = vmatprep.subr.bf16.mxu0 0
        %456 = vmatpush1.bf16.msra.mxu0 0
        %457 = vmatprep.subr.bf16.mxu0 0
        %458 = vmatpush1.bf16.msra.mxu0 0
        %459 = vmatprep.subr.bf16.mxu0 0
        %460 = vmatpush1.bf16.msra.mxu0 0
        %461 = vmatprep.subr.bf16.mxu0 0
        %462 = vmatpush1.bf16.msra.mxu0 0
        %463 = vmatprep.subr.bf16.mxu0 0
        %464 = vmatpush1.bf16.msra.mxu0 0
        %465 = vmatprep.subr.bf16.mxu0 0
        %466 = vmatpush1.bf16.msra.mxu0 0
        %467 = vmatprep.subr.bf16.mxu0 0
        %468 = vmatpush1.bf16.msra.mxu0 0
        %469 = vmatprep.subr.bf16.mxu0 0
        %470 = vmatpush1.bf16.msra.mxu0 0
        %471 = vmatprep.subr.bf16.mxu0 0
        %472 = vmatpush1.bf16.msra.mxu0 0
        %473 = vmatprep.subr.bf16.mxu0 0
        %474 = vmatpush1.bf16.msra.mxu0 0
        %475 = vmatprep.subr.bf16.mxu0 0
        %476 = vmatpush1.bf16.msra.mxu0 0
        %477 = vmatprep.mubr.bf16.mxu0 0
        %478 = vmatmul.mubr.bf16.gmra.mrb[0].mxu0 %v437
        %v479 = vpop.f32.mrb[0].mxu0
        %v480 = vadd.f32 %v433, %v479
        %v481 = vpop.f32.mrb[0].mxu0
        %v482 = vadd.f32 %v433, %v481
        %v483 = vpop.f32.mrb[0].mxu0
        %v484 = vpop.f32.mrb[0].mxu0
        %485 = vdwg.mxu0
        %486 = vst [vmem:[%s186] sm:$0xff] %v480
        %487 = vst [vmem:[%s186 + $0x8] sm:$0xff] %v482
        %s488 = sand.u32 %s96, 1
        %s489 = scalar_lea.sflag [#allocation4], %s488
        %s490 = sand.u32 %s96, 1
        %s491 = smul.addr %s490, 16
        %s492 = scalar_lea.vmem [#allocation5], %s491
        // Predicated region
        $region37: #{tpu_custom_call.1} parent=31 // pred_check
          %p493 = pneg %p106
        $region38: #{tpu_custom_call.1} parent=31 // pred_check_branch
          %495 = sbr.rel (%p493) target = $region40
        $region39: #{tpu_custom_call.1} parent=31 // pred_region
          %s497 = ssub.s32 256, 256
          %498 = vsyncadd %s489, %s497
          %s499 = smul.addr %s20, 2
          %s500 = smul.addr %s499, 128
          %s501 = scalar_lea.hbm %s3, %s500
          %s503 = sshll.u32 %s492, 4
          %s504 = int_to_ptr.vmem [resolvable:$true] %s503
          %506 = dma.vmem_to_hbm [thread:$0]  %s504, 256, %s501, %s489
        $region40: #{tpu_custom_call.1} parent=31 // pred_fallthru
          _
      $region32: #{tpu_custom_call.1} parent=5 // pred_fallthru
        _
      %p507 = scmp.le.s32.totalorder 2, %s15
      // Predicated region
      $region41: #{tpu_custom_call.1} parent=5 // pred_check
        %p508 = pneg %p507
      $region42: #{tpu_custom_call.1} parent=5 // pred_check_branch
        %510 = sbr.rel (%p508) target = $region44
      $region43: #{tpu_custom_call.1} parent=5 // pred_region
        %s511 = ssub.s32 %s15, 2
        // Predicated region
        $region45: #{tpu_custom_call.1} parent=43 // pred_check
          %p512 = pneg %p112
        $region46: #{tpu_custom_call.1} parent=43 // pred_check_branch
          %514 = sbr.rel (%p512) target = $region48
        $region47: #{tpu_custom_call.1} parent=43 // pred_region
          %s515 = sand.u32 %s97, 1
          %s516 = scalar_lea.sflag [#allocation4], %s515
          %s517 = sand.u32 %s97, 1
          %s518 = smul.addr %s517, 16
          %s519 = scalar_lea.vmem [#allocation5], %s518
          %520 = dma.done %s516, 256
        $region48: #{tpu_custom_call.1} parent=43 // pred_fallthru
          _
      $region44: #{tpu_custom_call.1} parent=5 // pred_fallthru
        _
    $region6: #{tpu_custom_call.1} parent=1 // loop_footer
      %s19 = sadd.s32 1, %s15
    $region7: #{tpu_custom_call.1} parent=1 // loop_footer_branch
      %14 = sbr.rel target = $region3
    $region8: #{tpu_custom_call.1} parent=1 // loop_exit
      _
    %521 = vsyncpa [#allocation3], 1
    %s522 = scalar_lea.sflag [#allocation3], 1
    %523 = vsyncpa %s522, 1
    %524 = vsyncpa [#allocation4], 1
    %s525 = scalar_lea.sflag [#allocation4], 1
    %526 = vsyncpa %s525, 1

</llo_original>
